<compile_context>
chip_gen: v6e
topology: v6e:2x2x1
jax: 0.10.0
libtpu: 0.0.40
codegen_flags: <defaults>
</compile_context>

<pallas_src>
import functools

import jax
import jax.numpy as jnp
from jax.experimental import pallas as pl
from jax.experimental.pallas import tpu as pltpu


def _kl_kernel(pmu_ref, psig_ref, qmu_ref, qsig_ref, out_ref, *, inv_mean):
    """One (bb, T, D) tile of the KL sum; accumulates into out_ref[0, 0] (SMEM)."""
    pid = pl.program_id(0)

    def load_f32(ref):
        x = ref[...]
        return x if x.dtype == jnp.float32 else x.astype(jnp.float32)

    pm = load_f32(pmu_ref)    # prior mu        (bb, T, D)
    ps = load_f32(psig_ref)   # prior sigma     (bb, T, D)
    qm = load_f32(qmu_ref)    # posterior mu    (bb, T, D)
    qs = load_f32(qsig_ref)   # posterior sigma (bb, T, D)

    # Timestep index per element (sublane iota, broadcast over batch & lanes).
    t_idx = jax.lax.broadcasted_iota(jnp.int32, pm.shape, 1)

    qvar = qs * qs
    pvar = ps * ps
    diff = qm - pm
    lq = jnp.log(qs)
    lp = jnp.log(ps)
    # Reciprocal on the EUP instead of a VALU divide.
    inv_2pvar = 0.5 * pl.reciprocal(pvar, approx=False)

    # Standard KL term (counts for original timesteps 1..T-1).
    kl = lp - lq - 0.5 + (qvar + diff * diff) * inv_2pvar
    # first_kl, split into its two row-local pieces:
    #   sigma part uses original timestep 1, mu part uses original timestep 0.
    first_sig = -lq - 0.5 + 0.5 * qvar        # contributes at t == 1
    first_mu = 0.5 * qm * qm                  # contributes at t == 0

    contrib = (jnp.where(t_idx >= 1, kl, 0.0)
               + jnp.where(t_idx == 1, first_sig, 0.0)
               + jnp.where(t_idx == 0, first_mu, 0.0))

    partial = jnp.sum(contrib)

    @pl.when(pid == 0)
    def _init():
        out_ref[0, 0] = jnp.float32(0.0)

    out_ref[0, 0] += partial

    @pl.when(pid == pl.num_programs(0) - 1)
    def _finalize():
        # torch.mean over the (B, T) rows of the summed-over-D tensor.
        out_ref[0, 0] = out_ref[0, 0] * jnp.float32(inv_mean)


def _largest_divisor_leq(n, cap):
    cap = max(1, min(n, cap))
    for d in range(cap, 0, -1):
        if n % d == 0:
            return d
    return 1


def probabilistic_loss(prior_mu, prior_sigma, posterior_mu, posterior_sigma):
    """KL(posterior || prior), identical to ProbabilisticLoss.forward."""
    B, T, D = posterior_mu.shape

    # Batch rows per tile: divisor of B so every block is full (no masking on
    # the batch axis), capped so one f32 tile stays <= ~1 MiB per input
    # (4 inputs x 2 pipeline buffers ~ 8 MiB, safe on v5e/v6e/v7x defaults).
    budget_elems = (1 << 20) // 4
    bb = _largest_divisor_leq(B, max(1, budget_elems // (T * D)))
    num_blocks = B // bb

    kernel = functools.partial(_kl_kernel, inv_mean=1.0 / float(B * T))

    in_spec = pl.BlockSpec((bb, T, D), lambda i: (i, 0, 0))
    out_spec = pl.BlockSpec((1, 1), lambda i: (0, 0),
                            memory_space=pltpu.MemorySpace.SMEM)

    out = pl.pallas_call(
        kernel,
        out_shape=jax.ShapeDtypeStruct((1, 1), jnp.float32),
        grid=(num_blocks,),
        in_specs=[in_spec, in_spec, in_spec, in_spec],
        out_specs=out_spec,
        compiler_params=pltpu.CompilerParams(
            dimension_semantics=("arbitrary",)),
    )(prior_mu, prior_sigma, posterior_mu, posterior_sigma)
    return out[0, 0]


def kl_loss(prior, posterior, alpha):
    """KLLoss.forward.  `prior` / `posterior` are dicts with 'mu' and 'sigma'.

    prior_loss and posterior_loss are numerically identical in the forward
    pass (detach only matters for gradients), so the kernel is invoked ONCE
    and the result reused for both terms of the alpha blend.
    """
    loss = probabilistic_loss(
        prior["mu"], prior["sigma"], posterior["mu"], posterior["sigma"]
    )
    return alpha * loss + (1.0 - alpha) * loss


def _reference_kl_loss(prior, posterior, alpha):
    """Pure-JAX reference mirroring the PyTorch code (for validation)."""
    def pl_ref(pmu, psig, qmu, qsig):
        q_var = qsig[:, 1:] ** 2
        p_var = psig[:, 1:] ** 2
        q_log = jnp.log(qsig[:, 1:])
        p_log = jnp.log(psig[:, 1:])
        kl_div = p_log - q_log - 0.5 + (q_var + (qmu[:, 1:] - pmu[:, 1:]) ** 2) / (2 * p_var)
        first = -q_log[:, :1] - 0.5 + (q_var[:, :1] + qmu[:, :1] ** 2) / 2
        kl_div = jnp.concatenate([first, kl_div], axis=1)
        return jnp.mean(jnp.sum(kl_div, axis=-1))

    l = pl_ref(prior["mu"], prior["sigma"], posterior["mu"], posterior["sigma"])
    return alpha * l + (1 - alpha) * l


if __name__ == "__main__":
    B, T, D = 2, 8, 32
    alpha = 0.75

    key = jax.random.PRNGKey(0)
    k1, k2, k3, k4 = jax.random.split(key, 4)

    # sigmas must be strictly positive
    prior = {
        "mu": jax.random.normal(k1, (B, T, D), dtype=jnp.float32),
        "sigma": jnp.exp(0.3 * jax.random.normal(k2, (B, T, D), dtype=jnp.float32)),
    }
    posterior = {
        "mu": jax.random.normal(k3, (B, T, D), dtype=jnp.float32),
        "sigma": jnp.exp(0.3 * jax.random.normal(k4, (B, T, D), dtype=jnp.float32)),
    }

    out = jax.block_until_ready(kl_loss(prior, posterior, alpha))
    ref = jax.block_until_ready(_reference_kl_loss(prior, posterior, alpha))

    assert jnp.allclose(out, ref, rtol=1e-4, atol=1e-5), (out, ref)
    print("KERNEL_OK")
</pallas_src>

<mosaic_0001>
module attributes {stable_mosaic.version = 11 : i64} {
  func.func @_kl_kernel(%arg0: i32, %arg1: memref<2x8x32xf32, #tpu.memory_space<vmem>>, %arg2: memref<2x8x32xf32, #tpu.memory_space<vmem>>, %arg3: memref<2x8x32xf32, #tpu.memory_space<vmem>>, %arg4: memref<2x8x32xf32, #tpu.memory_space<vmem>>, %arg5: memref<1x1xf32, #tpu.memory_space<smem>>) attributes {dimension_semantics = [#tpu.dimension_semantics<arbitrary>], iteration_bounds = array<i64: 1>, scalar_prefetch = 0 : i64, scratch_operands = 0 : i64, tpu.core_type = #tpu.core_type<tc>, window_params = [{transform_indices = @transform_0, window_bounds = array<i64: 2, 8, 32>}, {transform_indices = @transform_1, window_bounds = array<i64: 2, 8, 32>}, {transform_indices = @transform_2, window_bounds = array<i64: 2, 8, 32>}, {transform_indices = @transform_3, window_bounds = array<i64: 2, 8, 32>}, {transform_indices = @transform_4, window_bounds = array<i64: 1, 1>}]} {
    %c0 = arith.constant 0 : index
    %c0_0 = arith.constant 0 : index
    %c0_1 = arith.constant 0 : index
    %0 = vector.load %arg1[%c0, %c0_0, %c0_1] : memref<2x8x32xf32, #tpu.memory_space<vmem>>, vector<2x8x32xf32>
    %c0_2 = arith.constant 0 : index
    %c0_3 = arith.constant 0 : index
    %c0_4 = arith.constant 0 : index
    %1 = vector.load %arg2[%c0_2, %c0_3, %c0_4] : memref<2x8x32xf32, #tpu.memory_space<vmem>>, vector<2x8x32xf32>
    %c0_5 = arith.constant 0 : index
    %c0_6 = arith.constant 0 : index
    %c0_7 = arith.constant 0 : index
    %2 = vector.load %arg3[%c0_5, %c0_6, %c0_7] : memref<2x8x32xf32, #tpu.memory_space<vmem>>, vector<2x8x32xf32>
    %c0_8 = arith.constant 0 : index
    %c0_9 = arith.constant 0 : index
    %c0_10 = arith.constant 0 : index
    %3 = vector.load %arg4[%c0_8, %c0_9, %c0_10] : memref<2x8x32xf32, #tpu.memory_space<vmem>>, vector<2x8x32xf32>
    %4 = tpu.iota {dimensions = array<i32: 1>} : vector<2x8x32xi32>
    %5 = arith.mulf %3, %3 : vector<2x8x32xf32>
    %6 = arith.mulf %1, %1 : vector<2x8x32xf32>
    %7 = arith.subf %2, %0 : vector<2x8x32xf32>
    %8 = math.log %3 : vector<2x8x32xf32>
    %9 = math.log %1 : vector<2x8x32xf32>
    %10 = tpu.reciprocal %6 : vector<2x8x32xf32> -> vector<2x8x32xf32>
    %cst = arith.constant 5.000000e-01 : f32
    %11 = vector.broadcast %cst : f32 to vector<2x8x32xf32>
    %12 = arith.mulf %11, %10 : vector<2x8x32xf32>
    %13 = arith.subf %9, %8 : vector<2x8x32xf32>
    %cst_11 = arith.constant 5.000000e-01 : f32
    %14 = vector.broadcast %cst_11 : f32 to vector<2x8x32xf32>
    %15 = arith.subf %13, %14 : vector<2x8x32xf32>
    %16 = arith.mulf %7, %7 : vector<2x8x32xf32>
    %17 = arith.addf %5, %16 : vector<2x8x32xf32>
    %18 = arith.mulf %17, %12 : vector<2x8x32xf32>
    %19 = arith.addf %15, %18 : vector<2x8x32xf32>
    %cst_12 = arith.constant 0.000000e+00 : f32
    %20 = vector.broadcast %cst_12 : f32 to vector<2x8x32xf32>
    %21 = arith.subf %20, %8 : vector<2x8x32xf32>
    %cst_13 = arith.constant 5.000000e-01 : f32
    %22 = vector.broadcast %cst_13 : f32 to vector<2x8x32xf32>
    %23 = arith.subf %21, %22 : vector<2x8x32xf32>
    %cst_14 = arith.constant 5.000000e-01 : f32
    %24 = vector.broadcast %cst_14 : f32 to vector<2x8x32xf32>
    %25 = arith.mulf %24, %5 : vector<2x8x32xf32>
    %26 = arith.addf %23, %25 : vector<2x8x32xf32>
    %cst_15 = arith.constant 5.000000e-01 : f32
    %27 = vector.broadcast %cst_15 : f32 to vector<2x8x32xf32>
    %28 = arith.mulf %27, %2 : vector<2x8x32xf32>
    %29 = arith.mulf %28, %2 : vector<2x8x32xf32>
    %c1_i32 = arith.constant 1 : i32
    %30 = vector.broadcast %c1_i32 : i32 to vector<2x8x32xi32>
    %31 = arith.cmpi sge, %4, %30 : vector<2x8x32xi32>
    %cst_16 = arith.constant 0.000000e+00 : f32
    %32 = vector.broadcast %cst_16 : f32 to vector<2x8x32xf32>
    %33 = arith.select %31, %19, %32 : vector<2x8x32xi1>, vector<2x8x32xf32>
    %c1_i32_17 = arith.constant 1 : i32
    %34 = vector.broadcast %c1_i32_17 : i32 to vector<2x8x32xi32>
    %35 = arith.cmpi eq, %4, %34 : vector<2x8x32xi32>
    %cst_18 = arith.constant 0.000000e+00 : f32
    %36 = vector.broadcast %cst_18 : f32 to vector<2x8x32xf32>
    %37 = arith.select %35, %26, %36 : vector<2x8x32xi1>, vector<2x8x32xf32>
    %38 = arith.addf %33, %37 : vector<2x8x32xf32>
    %c0_i32 = arith.constant 0 : i32
    %39 = vector.broadcast %c0_i32 : i32 to vector<2x8x32xi32>
    %40 = arith.cmpi eq, %4, %39 : vector<2x8x32xi32>
    %cst_19 = arith.constant 0.000000e+00 : f32
    %41 = vector.broadcast %cst_19 : f32 to vector<2x8x32xf32>
    %42 = arith.select %40, %29, %41 : vector<2x8x32xi1>, vector<2x8x32xf32>
    %43 = arith.addf %38, %42 : vector<2x8x32xf32>
    %44 = vector.shape_cast %43 : vector<2x8x32xf32> to vector<1x2x8x32xf32>
    %cst_20 = arith.constant dense<0.000000e+00> : vector<1xf32>
    %45 = vector.multi_reduction <add>, %44, %cst_20 [1, 2, 3] : vector<1x2x8x32xf32> to vector<1xf32>
    %46 = vector.shape_cast %45 : vector<1xf32> to vector<1x1x1x1xf32>
    %47 = vector.extract %46[0, 0, 0, 0] : f32 from vector<1x1x1x1xf32>
    %c0_i32_21 = arith.constant 0 : i32
    %48 = arith.cmpi eq, %arg0, %c0_i32_21 : i32
    %49 = arith.extui %48 : i1 to i32
    %c0_i32_22 = arith.constant 0 : i32
    %50 = arith.cmpi ne, %49, %c0_i32_22 : i32
    scf.if %50 {
      %cst_29 = arith.constant 0.000000e+00 : f32
      %c0_30 = arith.constant 0 : index
      %c0_31 = arith.constant 0 : index
      %57 = memref.load %arg5[%c0_30, %c0_31] : memref<1x1xf32, #tpu.memory_space<smem>>
      memref.store %cst_29, %arg5[%c0_30, %c0_31] : memref<1x1xf32, #tpu.memory_space<smem>>
    } else {
    }
    %c0_23 = arith.constant 0 : index
    %c0_24 = arith.constant 0 : index
    %51 = memref.load %arg5[%c0_23, %c0_24] : memref<1x1xf32, #tpu.memory_space<smem>>
    %52 = arith.addf %51, %47 : f32
    %c0_25 = arith.constant 0 : index
    %c0_26 = arith.constant 0 : index
    %53 = memref.load %arg5[%c0_25, %c0_26] : memref<1x1xf32, #tpu.memory_space<smem>>
    memref.store %52, %arg5[%c0_25, %c0_26] : memref<1x1xf32, #tpu.memory_space<smem>>
    %c0_i32_27 = arith.constant 0 : i32
    %54 = arith.cmpi eq, %arg0, %c0_i32_27 : i32
    %55 = arith.extui %54 : i1 to i32
    %c0_i32_28 = arith.constant 0 : i32
    %56 = arith.cmpi ne, %55, %c0_i32_28 : i32
    scf.if %56 {
      %c0_29 = arith.constant 0 : index
      %c0_30 = arith.constant 0 : index
      %57 = memref.load %arg5[%c0_29, %c0_30] : memref<1x1xf32, #tpu.memory_space<smem>>
      %cst_31 = arith.constant 6.250000e-02 : f32
      %58 = arith.mulf %57, %cst_31 : f32
      %c0_32 = arith.constant 0 : index
      %c0_33 = arith.constant 0 : index
      %59 = memref.load %arg5[%c0_32, %c0_33] : memref<1x1xf32, #tpu.memory_space<smem>>
      memref.store %58, %arg5[%c0_32, %c0_33] : memref<1x1xf32, #tpu.memory_space<smem>>
    } else {
    }
    return
  }
  func.func @transform_0(%arg0: i32) -> (i32, i32, i32) {
    %c0_i32 = arith.constant 0 : i32
    %c0_i32_0 = arith.constant 0 : i32
    %c0_i32_1 = arith.constant 0 : i32
    return %arg0, %c0_i32, %c0_i32_0 : i32, i32, i32
  }
  func.func @transform_1(%arg0: i32) -> (i32, i32, i32) {
    %c0_i32 = arith.constant 0 : i32
    %c0_i32_0 = arith.constant 0 : i32
    %c0_i32_1 = arith.constant 0 : i32
    return %arg0, %c0_i32, %c0_i32_0 : i32, i32, i32
  }
  func.func @transform_2(%arg0: i32) -> (i32, i32, i32) {
    %c0_i32 = arith.constant 0 : i32
    %c0_i32_0 = arith.constant 0 : i32
    %c0_i32_1 = arith.constant 0 : i32
    return %arg0, %c0_i32, %c0_i32_0 : i32, i32, i32
  }
  func.func @transform_3(%arg0: i32) -> (i32, i32, i32) {
    %c0_i32 = arith.constant 0 : i32
    %c0_i32_0 = arith.constant 0 : i32
    %c0_i32_1 = arith.constant 0 : i32
    return %arg0, %c0_i32, %c0_i32_0 : i32, i32, i32
  }
  func.func @transform_4(%arg0: i32) -> (i32, i32) {
    %c0_i32 = arith.constant 0 : i32
    %c0_i32_0 = arith.constant 0 : i32
    %c0_i32_1 = arith.constant 0 : i32
    return %c0_i32, %c0_i32_0 : i32, i32
  }
}

</mosaic_0001>

<llo_original>
// kernel: tpu_custom_call.1
$region0: #{tpu_custom_call.1}
  #allocation0 [shape = 'u32[]', space=smem, size = 0x4, offset = 0x4, fixed_abs, tag = 'smem constant byte address 0x4 - core index']
  #allocation1 [shape = 'u32[144,128]{1,0:T(1,128)}', space=vmem, size = 0x12000, scoped, tag = 'internal scratch']
  %s0 = inlined_call_operand.hbm [shape: f32[2,8,32], index: 0, kind: input, shape index: {}]
  %s1 = inlined_call_operand.hbm [shape: f32[2,8,32], index: 1, kind: input, shape index: {}]
  %s2 = inlined_call_operand.hbm [shape: f32[2,8,32], index: 2, kind: input, shape index: {}]
  %s3 = inlined_call_operand.hbm [shape: f32[2,8,32], index: 3, kind: input, shape index: {}]
  %s4 = inlined_call_operand.hbm [shape: f32[1,1], index: 4, kind: output, shape index: {}]
  %s5 = sld [smem:[#allocation0]]
  $region50: #{tpu_custom_call.1} parent=0
    _
  %s7 = ssub.s32 1, %s5
  %s8 = scalar_select 0, %s7, %s5
  $region1: #{tpu_custom_call.1} parent=0
    #allocation2 [shape = 'u8[8192]{0}', space=vmem, size = 0x2000, scoped, tag = 'input window, operand 0, single buffered']
    #allocation3 [shape = 's32[1]{0}', space=sflag, size = 0x4, scoped, tag = 'scoped memory for tpu_custom_call.1']
    #allocation4 [shape = 's32[1]{0}', space=sflag, size = 0x4, scoped, tag = 'scoped memory for tpu_custom_call.1']
    #allocation5 [shape = 'u8[8192]{0}', space=vmem, size = 0x2000, scoped, tag = 'input window, operand 1, single buffered']
    #allocation6 [shape = 's32[1]{0}', space=sflag, size = 0x4, scoped, tag = 'scoped memory for tpu_custom_call.1']
    #allocation7 [shape = 'u8[8192]{0}', space=vmem, size = 0x2000, scoped, tag = 'input window, operand 2, single buffered']
    #allocation8 [shape = 'u8[8192]{0}', space=vmem, size = 0x2000, scoped, tag = 'input window, operand 3, single buffered']
    #allocation9 [shape = 's32[1]{0}', space=sflag, size = 0x4, scoped, tag = 'scoped memory for tpu_custom_call.1']
    #allocation10 [shape = 'u8[512]{0}', space=smem, size = 0x200, scoped, tag = 'output window, operand 0, single buffered']
    %9 = vsyncpa [#allocation3], 0
    %10 = vsyncpa [#allocation6], 0
    %11 = vsyncpa [#allocation9], 0
    %12 = vsyncpa [#allocation4], 0
    // Predicated region
    $region2: #{tpu_custom_call.1} parent=1 // pred_check
      _
    $region3: #{tpu_custom_call.1} parent=1 // pred_check_branch
      %14 = sbr.rel (0) target = $region5
    $region4: #{tpu_custom_call.1} parent=1 // pred_region
      %s16 = ssub.s32 256, 256
      %17 = vsyncadd [#allocation3], %s16
      %s18 = sshll.u32 [#allocation2], 4
      %s19 = int_to_ptr.vmem [resolvable:$true] %s18
      %24 = dma.hbm_to_vmem [thread:$0]  %s0, 256, %s19, [#allocation3], 128, 128, 8
    $region5: #{tpu_custom_call.1} parent=1 // pred_fallthru
      _
    // Predicated region
    $region6: #{tpu_custom_call.1} parent=1 // pred_check
      _
    $region7: #{tpu_custom_call.1} parent=1 // pred_check_branch
      %26 = sbr.rel (0) target = $region9
    $region8: #{tpu_custom_call.1} parent=1 // pred_region
      %s28 = ssub.s32 256, 256
      %29 = vsyncadd [#allocation6], %s28
      %s30 = sshll.u32 [#allocation5], 4
      %s31 = int_to_ptr.vmem [resolvable:$true] %s30
      %36 = dma.hbm_to_vmem [thread:$0]  %s1, 256, %s31, [#allocation6], 128, 128, 8
    $region9: #{tpu_custom_call.1} parent=1 // pred_fallthru
      _
    // Predicated region
    $region10: #{tpu_custom_call.1} parent=1 // pred_check
      _
    $region11: #{tpu_custom_call.1} parent=1 // pred_check_branch
      %38 = sbr.rel (0) target = $region13
    $region12: #{tpu_custom_call.1} parent=1 // pred_region
      %s40 = ssub.s32 256, 256
      %41 = vsyncadd [#allocation6], %s40
      %s42 = sshll.u32 [#allocation7], 4
      %s43 = int_to_ptr.vmem [resolvable:$true] %s42
      %48 = dma.hbm_to_vmem [thread:$0]  %s2, 256, %s43, [#allocation6], 128, 128, 8
    $region13: #{tpu_custom_call.1} parent=1 // pred_fallthru
      _
    // Predicated region
    $region14: #{tpu_custom_call.1} parent=1 // pred_check
      _
    $region15: #{tpu_custom_call.1} parent=1 // pred_check_branch
      %50 = sbr.rel (0) target = $region17
    $region16: #{tpu_custom_call.1} parent=1 // pred_region
      %s52 = ssub.s32 256, 256
      %53 = vsyncadd [#allocation9], %s52
      %s54 = sshll.u32 [#allocation8], 4
      %s55 = int_to_ptr.vmem [resolvable:$true] %s54
      %60 = dma.hbm_to_vmem [thread:$0]  %s3, 256, %s55, [#allocation9], 128, 128, 8
    $region17: #{tpu_custom_call.1} parent=1 // pred_fallthru
      _
    // Predicated region
    $region18: #{tpu_custom_call.1} parent=1 // pred_check
      _
    $region19: #{tpu_custom_call.1} parent=1 // pred_check_branch
      %62 = sbr.rel (0) target = $region21
    $region20: #{tpu_custom_call.1} parent=1 // pred_region
      %63 = dma.done [#allocation3], 256
    $region21: #{tpu_custom_call.1} parent=1 // pred_fallthru
      _
    // Predicated region
    $region22: #{tpu_custom_call.1} parent=1 // pred_check
      _
    $region23: #{tpu_custom_call.1} parent=1 // pred_check_branch
      %65 = sbr.rel (0) target = $region25
    $region24: #{tpu_custom_call.1} parent=1 // pred_region
      %66 = dma.done [#allocation6], 256
    $region25: #{tpu_custom_call.1} parent=1 // pred_fallthru
      _
    // Predicated region
    $region26: #{tpu_custom_call.1} parent=1 // pred_check
      _
    $region27: #{tpu_custom_call.1} parent=1 // pred_check_branch
      %68 = sbr.rel (0) target = $region29
    $region28: #{tpu_custom_call.1} parent=1 // pred_region
      %69 = dma.done [#allocation6], 256
    $region29: #{tpu_custom_call.1} parent=1 // pred_fallthru
      _
    // Predicated region
    $region30: #{tpu_custom_call.1} parent=1 // pred_check
      _
    $region31: #{tpu_custom_call.1} parent=1 // pred_check_branch
      %71 = sbr.rel (0) target = $region33
    $region32: #{tpu_custom_call.1} parent=1 // pred_region
      %72 = dma.done [#allocation9], 256
    $region33: #{tpu_custom_call.1} parent=1 // pred_fallthru
      _
    %v73 = vld [vmem:[#allocation2] sm:$0xff]
    %v74 = vld [vmem:[#allocation2 + $0x8] sm:$0xff]
    %v75 = vld [vmem:[#allocation5] sm:$0xff]
    %v76 = vld [vmem:[#allocation5 + $0x8] sm:$0xff]
    %v77 = vld [vmem:[#allocation7] sm:$0xff]
    %v78 = vld [vmem:[#allocation7 + $0x8] sm:$0xff]
    %v79 = vld [vmem:[#allocation8] sm:$0xff]
    %v80 = vld [vmem:[#allocation8 + $0x8] sm:$0xff]
    %v81 = vlaneseq
    %v82 = vshrl.u32 %v81, 7
    %v83 = vmul.f32 %v79, %v79
    %v84 = vmul.f32 %v80, %v80
    %v85 = vmul.f32 %v75, %v75
    %v86 = vmul.f32 %v76, %v76
    %v87 = vsub.f32 %v77, %v73
    %v88 = vsub.f32 %v78, %v74
    %v89 = vlog2.pop %v79
    %v90 = vmul.f32 %v89, 0.6931472
    %v91 = vlog2.pop %v80
    %v92 = vmul.f32 %v91, 0.6931472
    %v93 = vlog2.pop %v75
    %v94 = vmul.f32 %v93, 0.6931472
    %v95 = vlog2.pop %v76
    %v96 = vmul.f32 %v95, 0.6931472
    %v97 = vrcp.pop %v85
    %v98 = vrcp.pop %v86
    %v99 = vmul.f32 %v97, 0.5
    %v100 = vmul.f32 %v98, 0.5
    %v101 = vsub.f32 %v94, %v90
    %v102 = vsub.f32 %v96, %v92
    %v103 = vsub.f32 %v101, 0.5
    %v104 = vsub.f32 %v102, 0.5
    %v105 = vmul.f32 %v87, %v87
    %v106 = vmul.f32 %v88, %v88
    %v107 = vadd.f32 %v83, %v105
    %v108 = vadd.f32 %v84, %v106
    %v109 = vmul.f32 %v107, %v99
    %v110 = vmul.f32 %v108, %v100
    %v111 = vadd.f32 %v103, %v109
    %v112 = vadd.f32 %v104, %v110
    %v113 = vsub.f32 0.0, %v90
    %v114 = vsub.f32 0.0, %v92
    %v115 = vsub.f32 %v113, 0.5
    %v116 = vsub.f32 %v114, 0.5
    %v117 = vmul.f32 %v83, 0.5
    %v118 = vmul.f32 %v84, 0.5
    %v119 = vadd.f32 %v115, %v117
    %v120 = vadd.f32 %v116, %v118
    %v121 = vmul.f32 %v77, 0.5
    %v122 = vmul.f32 %v78, 0.5
    %v123 = vmul.f32 %v121, %v77
    %v124 = vmul.f32 %v122, %v78
    %vm125 = vcmp.ge.s32.totalorder %v82, 1
    %v126 = vsel %vm125, %v111, 0.0
    %v127 = vsel %vm125, %v112, 0.0
    %vm128 = vcmp.eq.s32.totalorder %v82, 1
    %v129 = vsel %vm128, %v119, 0.0
    %v130 = vsel %vm128, %v120, 0.0
    %v131 = vadd.f32 %v126, %v129
    %v132 = vadd.f32 %v127, %v130
    %vm133 = vcmp.eq.s32.totalorder %v82, 0
    %v134 = vsel %vm133, %v123, 0.0
    %v135 = vsel %vm133, %v124, 0.0
    %v136 = vadd.f32 %v131, %v134
    %v137 = vadd.f32 %v132, %v135
    %vm138 = vcmask 261120
    %v139 = vsel %vm138, %v136, 0.0
    %v140 = vsel %vm138, %v137, 0.0
    %v141 = vadd.f32 %v139, %v140
    %142 = vadd.xlane.f32.xlu0 %v141
    %v143 = vpop.xlane.xlu0 %142
    %v144 = vrot.slane %v143, 4
    %v145 = vadd.f32 %v143, %v144
    %v146 = vrot.slane %v145, 2
    %v147 = vadd.f32 %v145, %v146
    %v148 = vrot.slane %v147, 1
    %v149 = vadd.f32 %v147, %v148
    %s150 = vtos %v149
    %p151 = scmp.eq.s32.totalorder 0, 0
    // Predicated region
    $region34: #{tpu_custom_call.1} parent=1 // pred_check
      %p152 = pneg %p151
    $region35: #{tpu_custom_call.1} parent=1 // pred_check_branch
      %154 = sbr.rel (%p152) target = $region37
    $region36: #{tpu_custom_call.1} parent=1 // pred_region
      %s155 = scalar_lea.smem [#allocation10], 0
      %156 = sst [smem:[%s155]] 0.0
    $region37: #{tpu_custom_call.1} parent=1 // pred_fallthru
      _
    %s157 = sld [smem:[#allocation10]]
    %s158 = sadd.f32 %s157, %s150
    %s159 = scalar_lea.smem [#allocation10], 0
    %160 = sst [smem:[%s159]] %s158
    // Predicated region
    $region38: #{tpu_custom_call.1} parent=1 // pred_check
      %p161 = pneg %p151
    $region39: #{tpu_custom_call.1} parent=1 // pred_check_branch
      %163 = sbr.rel (%p161) target = $region41
    $region40: #{tpu_custom_call.1} parent=1 // pred_region
      %s164 = sld [smem:[#allocation10]]
      %s165 = smul.f32 %s164, 0.0625
      %166 = sst [smem:[%s159]] %s165
    $region41: #{tpu_custom_call.1} parent=1 // pred_fallthru
      _
    // Predicated region
    $region42: #{tpu_custom_call.1} parent=1 // pred_check
      _
    $region43: #{tpu_custom_call.1} parent=1 // pred_check_branch
      %168 = sbr.rel (0) target = $region45
    $region44: #{tpu_custom_call.1} parent=1 // pred_region
      %s170 = ssub.s32 16, 16
      %171 = vsyncadd [#allocation4], %s170
      %174 = dma.smem_to_hbm [#allocation10], 16, %s4, [#allocation4]
    $region45: #{tpu_custom_call.1} parent=1 // pred_fallthru
      _
    // Predicated region
    $region46: #{tpu_custom_call.1} parent=1 // pred_check
      _
    $region47: #{tpu_custom_call.1} parent=1 // pred_check_branch
      %176 = sbr.rel (0) target = $region49
    $region48: #{tpu_custom_call.1} parent=1 // pred_region
      %177 = dma.done [#allocation4], 16
    $region49: #{tpu_custom_call.1} parent=1 // pred_fallthru
      _
    %178 = sfence
    %179 = vsyncpa [#allocation3], 1
    %180 = vsyncpa [#allocation6], 1
    %181 = vsyncpa [#allocation9], 1
    %182 = vsyncpa [#allocation4], 1

</llo_original>
